<compile_context>
chip_gen: v6e
topology: v6e:2x2x1
jax: 0.10.0
libtpu: 0.0.40
codegen_flags: <defaults>
</compile_context>

<pallas_src>
import functools

import jax
import jax.numpy as jnp
from jax import lax
from jax.experimental import pallas as pl
from jax.experimental.pallas import tpu as pltpu


# ----------------------------------------------------------------------------
# Single fused encoder kernel (no grid: one invocation, everything in VMEM).
# ----------------------------------------------------------------------------
def _encoder_kernel(*refs, T, B, H, num_layers, question):
    """refs = [x, (wih, whh, bias) * L, w1t, b1, sentinel, w2t, b2,
               out_main, out_sent, gx_scr, h_all_scr, h_scr, c_scr]."""
    n_in = 1 + 3 * num_layers + 5
    x_ref = refs[0]
    layer_refs = [refs[1 + 3 * l: 4 + 3 * l] for l in range(num_layers)]
    w1_ref, b1_ref, sent_ref, w2_ref, b2_ref = refs[1 + 3 * num_layers:n_in]
    out_main_ref, out_sent_ref = refs[n_in], refs[n_in + 1]
    gx_scr, h_all_scr, h_scr, c_scr = refs[n_in + 2:]

    for l in range(num_layers):
        wih_ref, whh_ref, b_ref = layer_refs[l]

        # Hoisted input projection for all time steps in one bf16 MXU matmul,
        # fused (pre-summed, pre-permuted) biases folded in.     (T*B, 4H) f32
        layer_in = x_ref[...] if l == 0 else h_all_scr[...].astype(jnp.bfloat16)
        gx_scr[...] = (jnp.dot(layer_in, wih_ref[...],
                               preferred_element_type=jnp.float32)
                       + b_ref[...])

        h_scr[...] = jnp.zeros_like(h_scr)          # PyTorch h0 = 0
        c_scr[...] = jnp.zeros_like(c_scr)          # PyTorch c0 = 0

        def step(t, carry):
            off = t * B
            if B % 8 == 0:                          # static Python check
                off = pl.multiple_of(off, 8)
            g = (gx_scr[pl.ds(off, B), :]
                 + jnp.dot(h_scr[...].astype(jnp.bfloat16), whh_ref[...],
                           preferred_element_type=jnp.float32))   # (B, 4H) f32
            # Gate columns pre-permuted host-side to [i | f | o | g]:
            # one contiguous sigmoid over 3H, one tanh over H.
            sig = jax.nn.sigmoid(g[:, :3 * H])
            i_g = sig[:, 0:H]
            f_g = sig[:, H:2 * H]
            o_g = sig[:, 2 * H:3 * H]
            g_g = jnp.tanh(g[:, 3 * H:])

            c_new = f_g * c_scr[...] + i_g * g_g
            h_new = o_g * jnp.tanh(c_new)

            c_scr[...] = c_new
            h_scr[...] = h_new
            h_all_scr[pl.ds(off, B), :] = h_new     # f32, 8-sublane aligned
            return carry

        lax.fori_loop(0, T, step, 0, unroll=True)

    # linear1 on the contiguous LSTM output block: hidden -> E_pad (lane-dense)
    enc = (jnp.dot(h_all_scr[...].astype(jnp.bfloat16), w1_ref[...],
                   preferred_element_type=jnp.float32) + b1_ref[...])
    sent = sent_ref[...]

    if question:   # static Python bool — only the needed branch is traced
        enc = jnp.tanh(jnp.dot(enc.astype(jnp.bfloat16), w2_ref[...],
                               preferred_element_type=jnp.float32) + b2_ref[...])
        sent = jnp.tanh(jnp.dot(sent.astype(jnp.bfloat16), w2_ref[...],
                                preferred_element_type=jnp.float32) + b2_ref[...])

    # Two contiguous, lane-dense stores; no masked single-row interleave.
    out_main_ref[...] = enc                         # (T*B, E_pad)
    out_sent_ref[...] = sent                        # (T,   E_pad)


# ----------------------------------------------------------------------------
# Encoder forward (mirrors Encoder.forward) — one pallas_call + JAX glue.
# ----------------------------------------------------------------------------
def encoder_forward(params, input_data, input_lengths, training, question,
                    sentinel_key):
    del input_lengths  # packing is disabled in the reference module too
    T, B = input_data.shape          # T = batch (LSTM time axis), B = seq
    L = params["num_layers"]
    H = params["w_hh_0"].shape[1]

    # Embedding lookup (plain-JAX gather glue).
    emb = params["embedding"][input_data].astype(jnp.float32)   # (T, B, E)
    E = emb.shape[-1]
    E_pad = ((E + 127) // 128) * 128                 # lane-dense feature width

    # TODO(synk): dropout (p=1e-4) for training=True not implemented.

    # Sentinel vector (torch.randn equivalent), one row per batch element.
    sentinel = jax.random.normal(sentinel_key, (T, E), dtype=jnp.float32)
    sentinel = jnp.pad(sentinel, ((0, 0), (0, E_pad - E)))       # (T, E_pad)

    # PyTorch gate order is [i, f, g, o]; permute columns to [i, f, o, g].
    perm = jnp.concatenate([jnp.arange(0, 2 * H),
                            jnp.arange(3 * H, 4 * H),
                            jnp.arange(2 * H, 3 * H)])

    # Host-side weight prep: transposes, bf16 MXU dtype, fused biases, padding.
    args = [emb.reshape(T * B, E).astype(jnp.bfloat16)]
    for l in range(L):
        wih_t = params[f"w_ih_{l}"].T[:, perm]                   # (Ein, 4H)
        whh_t = params[f"w_hh_{l}"].T[:, perm]                   # (H,   4H)
        bias = (params[f"b_ih_{l}"] + params[f"b_hh_{l}"])[perm]
        args.append(wih_t.astype(jnp.bfloat16))
        args.append(whh_t.astype(jnp.bfloat16))
        args.append(bias.astype(jnp.float32).reshape(1, -1))     # (1, 4H) f32
    w1_t = jnp.pad(params["w1"].T, ((0, 0), (0, E_pad - E)))     # (H, E_pad)
    b1 = jnp.pad(params["b1"], (0, E_pad - E)).reshape(1, -1)
    w2_t = jnp.pad(params["w2"].T, ((0, E_pad - E), (0, E_pad - E)))
    b2 = jnp.pad(params["b2"], (0, E_pad - E)).reshape(1, -1)
    args.append(w1_t.astype(jnp.bfloat16))
    args.append(b1.astype(jnp.float32))
    args.append(sentinel)                                        # (T, E_pad) f32
    args.append(w2_t.astype(jnp.bfloat16))
    args.append(b2.astype(jnp.float32))

    out_main, out_sent = pl.pallas_call(
        functools.partial(_encoder_kernel, T=T, B=B, H=H,
                          num_layers=L, question=bool(question)),
        out_shape=(jax.ShapeDtypeStruct((T * B, E_pad), jnp.float32),
                   jax.ShapeDtypeStruct((T, E_pad), jnp.float32)),
        scratch_shapes=[
            pltpu.VMEM((T * B, 4 * H), jnp.float32),   # hoisted gate inputs
            pltpu.VMEM((T * B, H), jnp.float32),       # per-layer hidden outputs
            pltpu.VMEM((B, H), jnp.float32),           # h state
            pltpu.VMEM((B, H), jnp.float32),           # c state
        ],
    )(*args)

    # Free layout plumbing in the wrapper: slice off the lane padding and
    # interleave the sentinel along the seq axis.
    enc = out_main.reshape(T, B, E_pad)[:, :, :E]
    sent = out_sent[:, None, :E]
    return jnp.concatenate([enc, sent], axis=1)                  # (T, B+1, E)


# ----------------------------------------------------------------------------
# Deterministic parameter construction.
# ----------------------------------------------------------------------------
def make_params(key, vocab_size, embedding_dim, hidden_dim, num_layers):
    keys = jax.random.split(key, 4 + 4 * num_layers)
    p = {"num_layers": num_layers}
    p["embedding"] = 0.1 * jax.random.normal(
        keys[0], (vocab_size, embedding_dim), dtype=jnp.float32)
    for l in range(num_layers):
        in_dim = embedding_dim if l == 0 else hidden_dim
        k = keys[1 + 4 * l: 5 + 4 * l]
        s = 1.0 / jnp.sqrt(hidden_dim)
        p[f"w_ih_{l}"] = s * jax.random.normal(k[0], (4 * hidden_dim, in_dim),
                                               dtype=jnp.float32)
        p[f"w_hh_{l}"] = s * jax.random.normal(k[1], (4 * hidden_dim, hidden_dim),
                                               dtype=jnp.float32)
        p[f"b_ih_{l}"] = s * jax.random.normal(k[2], (4 * hidden_dim,),
                                               dtype=jnp.float32)
        p[f"b_hh_{l}"] = s * jax.random.normal(k[3], (4 * hidden_dim,),
                                               dtype=jnp.float32)
    p["w1"] = 0.1 * jax.random.normal(keys[-3], (embedding_dim, hidden_dim),
                                      dtype=jnp.float32)
    p["b1"] = jnp.zeros((embedding_dim,), jnp.float32)
    p["w2"] = 0.1 * jax.random.normal(keys[-2], (embedding_dim, embedding_dim),
                                      dtype=jnp.float32)
    p["b2"] = jnp.zeros((embedding_dim,), jnp.float32)
    return p


if __name__ == "__main__":
    key = jax.random.PRNGKey(0)
    k_params, k_idx, k_sent = jax.random.split(key, 3)

    batch, seq = 2, 8
    vocab_size, embedding_dim, hidden_dim, num_layers = 32, 16, 32, 2

    params = make_params(k_params, vocab_size, embedding_dim, hidden_dim,
                         num_layers)

    input_data = jax.random.randint(k_idx, (batch, seq), 0, vocab_size,
                                    dtype=jnp.int32)
    input_lengths = jnp.full((batch,), seq, dtype=jnp.int32)

    out = encoder_forward(params, input_data, input_lengths,
                          training=False, question=True,
                          sentinel_key=k_sent)
    out = jax.block_until_ready(out)

    assert out.shape == (batch, seq + 1, embedding_dim), out.shape
    assert out.dtype == jnp.float32
    assert bool(jnp.all(jnp.isfinite(out)))
    print("KERNEL_OK")
</pallas_src>

<mosaic_0001>
module attributes {stable_mosaic.version = 11 : i64} {
  func.func @_encoder_kernel(%arg0: memref<16x16xbf16, #tpu.memory_space<vmem>>, %arg1: memref<16x128xbf16, #tpu.memory_space<vmem>>, %arg2: memref<32x128xbf16, #tpu.memory_space<vmem>>, %arg3: memref<1x128xf32, #tpu.memory_space<vmem>>, %arg4: memref<32x128xbf16, #tpu.memory_space<vmem>>, %arg5: memref<32x128xbf16, #tpu.memory_space<vmem>>, %arg6: memref<1x128xf32, #tpu.memory_space<vmem>>, %arg7: memref<32x128xbf16, #tpu.memory_space<vmem>>, %arg8: memref<1x128xf32, #tpu.memory_space<vmem>>, %arg9: memref<2x128xf32, #tpu.memory_space<vmem>>, %arg10: memref<128x128xbf16, #tpu.memory_space<vmem>>, %arg11: memref<1x128xf32, #tpu.memory_space<vmem>>, %arg12: memref<16x128xf32, #tpu.memory_space<vmem>>, %arg13: memref<2x128xf32, #tpu.memory_space<vmem>>, %arg14: memref<16x128xf32, #tpu.memory_space<vmem>>, %arg15: memref<16x32xf32, #tpu.memory_space<vmem>>, %arg16: memref<8x32xf32, #tpu.memory_space<vmem>>, %arg17: memref<8x32xf32, #tpu.memory_space<vmem>>) attributes {dimension_semantics = [], scalar_prefetch = 0 : i64, scratch_operands = 4 : i64, tpu.core_type = #tpu.core_type<tc>} {
    %c0 = arith.constant 0 : index
    %c0_0 = arith.constant 0 : index
    %0 = vector.load %arg0[%c0, %c0_0] : memref<16x16xbf16, #tpu.memory_space<vmem>>, vector<16x16xbf16>
    %c0_1 = arith.constant 0 : index
    %c0_2 = arith.constant 0 : index
    %1 = vector.load %arg1[%c0_1, %c0_2] : memref<16x128xbf16, #tpu.memory_space<vmem>>, vector<16x128xbf16>
    %cst = arith.constant dense<0.000000e+00> : vector<16x128xf32>
    %2 = tpu.matmul %0, %1, %cst {dimension_numbers = #tpu.dot_dimension_numbers<[1], [0], [0], [1], [0, 0, 1, 1], [], []>} : vector<16x16xbf16>, vector<16x128xbf16>, vector<16x128xf32> -> vector<16x128xf32>
    %c0_3 = arith.constant 0 : index
    %c0_4 = arith.constant 0 : index
    %3 = vector.load %arg3[%c0_3, %c0_4] : memref<1x128xf32, #tpu.memory_space<vmem>>, vector<1x128xf32>
    %4 = vector.broadcast %3 : vector<1x128xf32> to vector<16x128xf32>
    %5 = arith.addf %2, %4 : vector<16x128xf32>
    %c0_5 = arith.constant 0 : index
    %c0_6 = arith.constant 0 : index
    %6 = vector.load %arg14[%c0_5, %c0_6] : memref<16x128xf32, #tpu.memory_space<vmem>>, vector<16x128xf32>
    tpu.vector_store %arg14[%c0_5, %c0_6], %5 {strides = array<i32>} : memref<16x128xf32, #tpu.memory_space<vmem>>, vector<16x128xf32>,
    %cst_7 = arith.constant 0.000000e+00 : f32
    %7 = vector.broadcast %cst_7 : f32 to vector<8x32xf32>
    %c0_8 = arith.constant 0 : index
    %c0_9 = arith.constant 0 : index
    %8 = vector.load %arg16[%c0_8, %c0_9] : memref<8x32xf32, #tpu.memory_space<vmem>>, vector<8x32xf32>
    tpu.vector_store %arg16[%c0_8, %c0_9], %7 {strides = array<i32>} : memref<8x32xf32, #tpu.memory_space<vmem>>, vector<8x32xf32>,
    %cst_10 = arith.constant 0.000000e+00 : f32
    %9 = vector.broadcast %cst_10 : f32 to vector<8x32xf32>
    %c0_11 = arith.constant 0 : index
    %c0_12 = arith.constant 0 : index
    %10 = vector.load %arg17[%c0_11, %c0_12] : memref<8x32xf32, #tpu.memory_space<vmem>>, vector<8x32xf32>
    tpu.vector_store %arg17[%c0_11, %c0_12], %9 {strides = array<i32>} : memref<8x32xf32, #tpu.memory_space<vmem>>, vector<8x32xf32>,
    %c0_i32 = arith.constant 0 : i32
    %c8_i32 = arith.constant 8 : i32
    %11 = arith.muli %c0_i32, %c8_i32 : i32
    %12 = tpu.assume_multiple %11, 8 : i32
    %13 = arith.index_cast %12 : i32 to index
    %c0_13 = arith.constant 0 : index
    %14 = vector.load %arg14[%13, %c0_13] : memref<16x128xf32, #tpu.memory_space<vmem>>, vector<8x128xf32>
    %c0_14 = arith.constant 0 : index
    %c0_15 = arith.constant 0 : index
    %15 = vector.load %arg16[%c0_14, %c0_15] : memref<8x32xf32, #tpu.memory_space<vmem>>, vector<8x32xf32>
    %16 = arith.truncf %15 : vector<8x32xf32> to vector<8x32xbf16>
    %c0_16 = arith.constant 0 : index
    %c0_17 = arith.constant 0 : index
    %17 = vector.load %arg2[%c0_16, %c0_17] : memref<32x128xbf16, #tpu.memory_space<vmem>>, vector<32x128xbf16>
    %cst_18 = arith.constant dense<0.000000e+00> : vector<8x128xf32>
    %18 = tpu.matmul %16, %17, %cst_18 {dimension_numbers = #tpu.dot_dimension_numbers<[1], [0], [0], [1], [0, 0, 1, 1], [], []>} : vector<8x32xbf16>, vector<32x128xbf16>, vector<8x128xf32> -> vector<8x128xf32>
    %19 = arith.addf %14, %18 : vector<8x128xf32>
    %20 = vector.extract_strided_slice %19 {offsets = [0, 0], sizes = [8, 96], strides = [1, 1]} : vector<8x128xf32> to vector<8x96xf32>
    %21 = arith.negf %20 : vector<8x96xf32>
    %22 = math.exp %21 : vector<8x96xf32>
    %cst_19 = arith.constant 1.000000e+00 : f32
    %23 = vector.broadcast %cst_19 : f32 to vector<8x96xf32>
    %24 = arith.addf %23, %22 : vector<8x96xf32>
    %25 = arith.divf %23, %24 : vector<8x96xf32>
    %26 = vector.extract_strided_slice %25 {offsets = [0, 0], sizes = [8, 32], strides = [1, 1]} : vector<8x96xf32> to vector<8x32xf32>
    %27 = vector.extract_strided_slice %25 {offsets = [0, 32], sizes = [8, 32], strides = [1, 1]} : vector<8x96xf32> to vector<8x32xf32>
    %28 = vector.extract_strided_slice %25 {offsets = [0, 64], sizes = [8, 32], strides = [1, 1]} : vector<8x96xf32> to vector<8x32xf32>
    %29 = vector.extract_strided_slice %19 {offsets = [0, 96], sizes = [8, 32], strides = [1, 1]} : vector<8x128xf32> to vector<8x32xf32>
    %30 = math.tanh %29 : vector<8x32xf32>
    %c0_20 = arith.constant 0 : index
    %c0_21 = arith.constant 0 : index
    %31 = vector.load %arg17[%c0_20, %c0_21] : memref<8x32xf32, #tpu.memory_space<vmem>>, vector<8x32xf32>
    %32 = arith.mulf %27, %31 : vector<8x32xf32>
    %33 = arith.mulf %26, %30 : vector<8x32xf32>
    %34 = arith.addf %32, %33 : vector<8x32xf32>
    %35 = math.tanh %34 : vector<8x32xf32>
    %36 = arith.mulf %28, %35 : vector<8x32xf32>
    %c0_22 = arith.constant 0 : index
    %c0_23 = arith.constant 0 : index
    %37 = vector.load %arg17[%c0_22, %c0_23] : memref<8x32xf32, #tpu.memory_space<vmem>>, vector<8x32xf32>
    tpu.vector_store %arg17[%c0_22, %c0_23], %34 {strides = array<i32>} : memref<8x32xf32, #tpu.memory_space<vmem>>, vector<8x32xf32>,
    %c0_24 = arith.constant 0 : index
    %c0_25 = arith.constant 0 : index
    %38 = vector.load %arg16[%c0_24, %c0_25] : memref<8x32xf32, #tpu.memory_space<vmem>>, vector<8x32xf32>
    tpu.vector_store %arg16[%c0_24, %c0_25], %36 {strides = array<i32>} : memref<8x32xf32, #tpu.memory_space<vmem>>, vector<8x32xf32>,
    %39 = arith.index_cast %12 : i32 to index
    %c0_26 = arith.constant 0 : index
    %40 = vector.load %arg15[%39, %c0_26] : memref<16x32xf32, #tpu.memory_space<vmem>>, vector<8x32xf32>
    tpu.vector_store %arg15[%39, %c0_26], %36 {strides = array<i32>} : memref<16x32xf32, #tpu.memory_space<vmem>>, vector<8x32xf32>,
    %c1_i32 = arith.constant 1 : i32
    %c8_i32_27 = arith.constant 8 : i32
    %41 = arith.muli %c1_i32, %c8_i32_27 : i32
    %42 = tpu.assume_multiple %41, 8 : i32
    %43 = arith.index_cast %42 : i32 to index
    %c0_28 = arith.constant 0 : index
    %44 = vector.load %arg14[%43, %c0_28] : memref<16x128xf32, #tpu.memory_space<vmem>>, vector<8x128xf32>
    %c0_29 = arith.constant 0 : index
    %c0_30 = arith.constant 0 : index
    %45 = vector.load %arg16[%c0_29, %c0_30] : memref<8x32xf32, #tpu.memory_space<vmem>>, vector<8x32xf32>
    %46 = arith.truncf %45 : vector<8x32xf32> to vector<8x32xbf16>
    %c0_31 = arith.constant 0 : index
    %c0_32 = arith.constant 0 : index
    %47 = vector.load %arg2[%c0_31, %c0_32] : memref<32x128xbf16, #tpu.memory_space<vmem>>, vector<32x128xbf16>
    %cst_33 = arith.constant dense<0.000000e+00> : vector<8x128xf32>
    %48 = tpu.matmul %46, %47, %cst_33 {dimension_numbers = #tpu.dot_dimension_numbers<[1], [0], [0], [1], [0, 0, 1, 1], [], []>} : vector<8x32xbf16>, vector<32x128xbf16>, vector<8x128xf32> -> vector<8x128xf32>
    %49 = arith.addf %44, %48 : vector<8x128xf32>
    %50 = vector.extract_strided_slice %49 {offsets = [0, 0], sizes = [8, 96], strides = [1, 1]} : vector<8x128xf32> to vector<8x96xf32>
    %51 = arith.negf %50 : vector<8x96xf32>
    %52 = math.exp %51 : vector<8x96xf32>
    %cst_34 = arith.constant 1.000000e+00 : f32
    %53 = vector.broadcast %cst_34 : f32 to vector<8x96xf32>
    %54 = arith.addf %53, %52 : vector<8x96xf32>
    %55 = arith.divf %53, %54 : vector<8x96xf32>
    %56 = vector.extract_strided_slice %55 {offsets = [0, 0], sizes = [8, 32], strides = [1, 1]} : vector<8x96xf32> to vector<8x32xf32>
    %57 = vector.extract_strided_slice %55 {offsets = [0, 32], sizes = [8, 32], strides = [1, 1]} : vector<8x96xf32> to vector<8x32xf32>
    %58 = vector.extract_strided_slice %55 {offsets = [0, 64], sizes = [8, 32], strides = [1, 1]} : vector<8x96xf32> to vector<8x32xf32>
    %59 = vector.extract_strided_slice %49 {offsets = [0, 96], sizes = [8, 32], strides = [1, 1]} : vector<8x128xf32> to vector<8x32xf32>
    %60 = math.tanh %59 : vector<8x32xf32>
    %c0_35 = arith.constant 0 : index
    %c0_36 = arith.constant 0 : index
    %61 = vector.load %arg17[%c0_35, %c0_36] : memref<8x32xf32, #tpu.memory_space<vmem>>, vector<8x32xf32>
    %62 = arith.mulf %57, %61 : vector<8x32xf32>
    %63 = arith.mulf %56, %60 : vector<8x32xf32>
    %64 = arith.addf %62, %63 : vector<8x32xf32>
    %65 = math.tanh %64 : vector<8x32xf32>
    %66 = arith.mulf %58, %65 : vector<8x32xf32>
    %c0_37 = arith.constant 0 : index
    %c0_38 = arith.constant 0 : index
    %67 = vector.load %arg17[%c0_37, %c0_38] : memref<8x32xf32, #tpu.memory_space<vmem>>, vector<8x32xf32>
    tpu.vector_store %arg17[%c0_37, %c0_38], %64 {strides = array<i32>} : memref<8x32xf32, #tpu.memory_space<vmem>>, vector<8x32xf32>,
    %c0_39 = arith.constant 0 : index
    %c0_40 = arith.constant 0 : index
    %68 = vector.load %arg16[%c0_39, %c0_40] : memref<8x32xf32, #tpu.memory_space<vmem>>, vector<8x32xf32>
    tpu.vector_store %arg16[%c0_39, %c0_40], %66 {strides = array<i32>} : memref<8x32xf32, #tpu.memory_space<vmem>>, vector<8x32xf32>,
    %69 = arith.index_cast %42 : i32 to index
    %c0_41 = arith.constant 0 : index
    %70 = vector.load %arg15[%69, %c0_41] : memref<16x32xf32, #tpu.memory_space<vmem>>, vector<8x32xf32>
    tpu.vector_store %arg15[%69, %c0_41], %66 {strides = array<i32>} : memref<16x32xf32, #tpu.memory_space<vmem>>, vector<8x32xf32>,
    %c2_i32 = arith.constant 2 : i32
    %c0_42 = arith.constant 0 : index
    %c0_43 = arith.constant 0 : index
    %71 = vector.load %arg15[%c0_42, %c0_43] : memref<16x32xf32, #tpu.memory_space<vmem>>, vector<16x32xf32>
    %72 = arith.truncf %71 : vector<16x32xf32> to vector<16x32xbf16>
    %c0_44 = arith.constant 0 : index
    %c0_45 = arith.constant 0 : index
    %73 = vector.load %arg4[%c0_44, %c0_45] : memref<32x128xbf16, #tpu.memory_space<vmem>>, vector<32x128xbf16>
    %cst_46 = arith.constant dense<0.000000e+00> : vector<16x128xf32>
    %74 = tpu.matmul %72, %73, %cst_46 {dimension_numbers = #tpu.dot_dimension_numbers<[1], [0], [0], [1], [0, 0, 1, 1], [], []>} : vector<16x32xbf16>, vector<32x128xbf16>, vector<16x128xf32> -> vector<16x128xf32>
    %c0_47 = arith.constant 0 : index
    %c0_48 = arith.constant 0 : index
    %75 = vector.load %arg6[%c0_47, %c0_48] : memref<1x128xf32, #tpu.memory_space<vmem>>, vector<1x128xf32>
    %76 = vector.broadcast %75 : vector<1x128xf32> to vector<16x128xf32>
    %77 = arith.addf %74, %76 : vector<16x128xf32>
    %c0_49 = arith.constant 0 : index
    %c0_50 = arith.constant 0 : index
    %78 = vector.load %arg14[%c0_49, %c0_50] : memref<16x128xf32, #tpu.memory_space<vmem>>, vector<16x128xf32>
    tpu.vector_store %arg14[%c0_49, %c0_50], %77 {strides = array<i32>} : memref<16x128xf32, #tpu.memory_space<vmem>>, vector<16x128xf32>,
    %cst_51 = arith.constant 0.000000e+00 : f32
    %79 = vector.broadcast %cst_51 : f32 to vector<8x32xf32>
    %c0_52 = arith.constant 0 : index
    %c0_53 = arith.constant 0 : index
    %80 = vector.load %arg16[%c0_52, %c0_53] : memref<8x32xf32, #tpu.memory_space<vmem>>, vector<8x32xf32>
    tpu.vector_store %arg16[%c0_52, %c0_53], %79 {strides = array<i32>} : memref<8x32xf32, #tpu.memory_space<vmem>>, vector<8x32xf32>,
    %cst_54 = arith.constant 0.000000e+00 : f32
    %81 = vector.broadcast %cst_54 : f32 to vector<8x32xf32>
    %c0_55 = arith.constant 0 : index
    %c0_56 = arith.constant 0 : index
    %82 = vector.load %arg17[%c0_55, %c0_56] : memref<8x32xf32, #tpu.memory_space<vmem>>, vector<8x32xf32>
    tpu.vector_store %arg17[%c0_55, %c0_56], %81 {strides = array<i32>} : memref<8x32xf32, #tpu.memory_space<vmem>>, vector<8x32xf32>,
    %c0_i32_57 = arith.constant 0 : i32
    %c8_i32_58 = arith.constant 8 : i32
    %83 = arith.muli %c0_i32_57, %c8_i32_58 : i32
    %84 = tpu.assume_multiple %83, 8 : i32
    %85 = arith.index_cast %84 : i32 to index
    %c0_59 = arith.constant 0 : index
    %86 = vector.load %arg14[%85, %c0_59] : memref<16x128xf32, #tpu.memory_space<vmem>>, vector<8x128xf32>
    %c0_60 = arith.constant 0 : index
    %c0_61 = arith.constant 0 : index
    %87 = vector.load %arg16[%c0_60, %c0_61] : memref<8x32xf32, #tpu.memory_space<vmem>>, vector<8x32xf32>
    %88 = arith.truncf %87 : vector<8x32xf32> to vector<8x32xbf16>
    %c0_62 = arith.constant 0 : index
    %c0_63 = arith.constant 0 : index
    %89 = vector.load %arg5[%c0_62, %c0_63] : memref<32x128xbf16, #tpu.memory_space<vmem>>, vector<32x128xbf16>
    %cst_64 = arith.constant dense<0.000000e+00> : vector<8x128xf32>
    %90 = tpu.matmul %88, %89, %cst_64 {dimension_numbers = #tpu.dot_dimension_numbers<[1], [0], [0], [1], [0, 0, 1, 1], [], []>} : vector<8x32xbf16>, vector<32x128xbf16>, vector<8x128xf32> -> vector<8x128xf32>
    %91 = arith.addf %86, %90 : vector<8x128xf32>
    %92 = vector.extract_strided_slice %91 {offsets = [0, 0], sizes = [8, 96], strides = [1, 1]} : vector<8x128xf32> to vector<8x96xf32>
    %93 = arith.negf %92 : vector<8x96xf32>
    %94 = math.exp %93 : vector<8x96xf32>
    %cst_65 = arith.constant 1.000000e+00 : f32
    %95 = vector.broadcast %cst_65 : f32 to vector<8x96xf32>
    %96 = arith.addf %95, %94 : vector<8x96xf32>
    %97 = arith.divf %95, %96 : vector<8x96xf32>
    %98 = vector.extract_strided_slice %97 {offsets = [0, 0], sizes = [8, 32], strides = [1, 1]} : vector<8x96xf32> to vector<8x32xf32>
    %99 = vector.extract_strided_slice %97 {offsets = [0, 32], sizes = [8, 32], strides = [1, 1]} : vector<8x96xf32> to vector<8x32xf32>
    %100 = vector.extract_strided_slice %97 {offsets = [0, 64], sizes = [8, 32], strides = [1, 1]} : vector<8x96xf32> to vector<8x32xf32>
    %101 = vector.extract_strided_slice %91 {offsets = [0, 96], sizes = [8, 32], strides = [1, 1]} : vector<8x128xf32> to vector<8x32xf32>
    %102 = math.tanh %101 : vector<8x32xf32>
    %c0_66 = arith.constant 0 : index
    %c0_67 = arith.constant 0 : index
    %103 = vector.load %arg17[%c0_66, %c0_67] : memref<8x32xf32, #tpu.memory_space<vmem>>, vector<8x32xf32>
    %104 = arith.mulf %99, %103 : vector<8x32xf32>
    %105 = arith.mulf %98, %102 : vector<8x32xf32>
    %106 = arith.addf %104, %105 : vector<8x32xf32>
    %107 = math.tanh %106 : vector<8x32xf32>
    %108 = arith.mulf %100, %107 : vector<8x32xf32>
    %c0_68 = arith.constant 0 : index
    %c0_69 = arith.constant 0 : index
    %109 = vector.load %arg17[%c0_68, %c0_69] : memref<8x32xf32, #tpu.memory_space<vmem>>, vector<8x32xf32>
    tpu.vector_store %arg17[%c0_68, %c0_69], %106 {strides = array<i32>} : memref<8x32xf32, #tpu.memory_space<vmem>>, vector<8x32xf32>,
    %c0_70 = arith.constant 0 : index
    %c0_71 = arith.constant 0 : index
    %110 = vector.load %arg16[%c0_70, %c0_71] : memref<8x32xf32, #tpu.memory_space<vmem>>, vector<8x32xf32>
    tpu.vector_store %arg16[%c0_70, %c0_71], %108 {strides = array<i32>} : memref<8x32xf32, #tpu.memory_space<vmem>>, vector<8x32xf32>,
    %111 = arith.index_cast %84 : i32 to index
    %c0_72 = arith.constant 0 : index
    %112 = vector.load %arg15[%111, %c0_72] : memref<16x32xf32, #tpu.memory_space<vmem>>, vector<8x32xf32>
    tpu.vector_store %arg15[%111, %c0_72], %108 {strides = array<i32>} : memref<16x32xf32, #tpu.memory_space<vmem>>, vector<8x32xf32>,
    %c1_i32_73 = arith.constant 1 : i32
    %c8_i32_74 = arith.constant 8 : i32
    %113 = arith.muli %c1_i32_73, %c8_i32_74 : i32
    %114 = tpu.assume_multiple %113, 8 : i32
    %115 = arith.index_cast %114 : i32 to index
    %c0_75 = arith.constant 0 : index
    %116 = vector.load %arg14[%115, %c0_75] : memref<16x128xf32, #tpu.memory_space<vmem>>, vector<8x128xf32>
    %c0_76 = arith.constant 0 : index
    %c0_77 = arith.constant 0 : index
    %117 = vector.load %arg16[%c0_76, %c0_77] : memref<8x32xf32, #tpu.memory_space<vmem>>, vector<8x32xf32>
    %118 = arith.truncf %117 : vector<8x32xf32> to vector<8x32xbf16>
    %c0_78 = arith.constant 0 : index
    %c0_79 = arith.constant 0 : index
    %119 = vector.load %arg5[%c0_78, %c0_79] : memref<32x128xbf16, #tpu.memory_space<vmem>>, vector<32x128xbf16>
    %cst_80 = arith.constant dense<0.000000e+00> : vector<8x128xf32>
    %120 = tpu.matmul %118, %119, %cst_80 {dimension_numbers = #tpu.dot_dimension_numbers<[1], [0], [0], [1], [0, 0, 1, 1], [], []>} : vector<8x32xbf16>, vector<32x128xbf16>, vector<8x128xf32> -> vector<8x128xf32>
    %121 = arith.addf %116, %120 : vector<8x128xf32>
    %122 = vector.extract_strided_slice %121 {offsets = [0, 0], sizes = [8, 96], strides = [1, 1]} : vector<8x128xf32> to vector<8x96xf32>
    %123 = arith.negf %122 : vector<8x96xf32>
    %124 = math.exp %123 : vector<8x96xf32>
    %cst_81 = arith.constant 1.000000e+00 : f32
    %125 = vector.broadcast %cst_81 : f32 to vector<8x96xf32>
    %126 = arith.addf %125, %124 : vector<8x96xf32>
    %127 = arith.divf %125, %126 : vector<8x96xf32>
    %128 = vector.extract_strided_slice %127 {offsets = [0, 0], sizes = [8, 32], strides = [1, 1]} : vector<8x96xf32> to vector<8x32xf32>
    %129 = vector.extract_strided_slice %127 {offsets = [0, 32], sizes = [8, 32], strides = [1, 1]} : vector<8x96xf32> to vector<8x32xf32>
    %130 = vector.extract_strided_slice %127 {offsets = [0, 64], sizes = [8, 32], strides = [1, 1]} : vector<8x96xf32> to vector<8x32xf32>
    %131 = vector.extract_strided_slice %121 {offsets = [0, 96], sizes = [8, 32], strides = [1, 1]} : vector<8x128xf32> to vector<8x32xf32>
    %132 = math.tanh %131 : vector<8x32xf32>
    %c0_82 = arith.constant 0 : index
    %c0_83 = arith.constant 0 : index
    %133 = vector.load %arg17[%c0_82, %c0_83] : memref<8x32xf32, #tpu.memory_space<vmem>>, vector<8x32xf32>
    %134 = arith.mulf %129, %133 : vector<8x32xf32>
    %135 = arith.mulf %128, %132 : vector<8x32xf32>
    %136 = arith.addf %134, %135 : vector<8x32xf32>
    %137 = math.tanh %136 : vector<8x32xf32>
    %138 = arith.mulf %130, %137 : vector<8x32xf32>
    %c0_84 = arith.constant 0 : index
    %c0_85 = arith.constant 0 : index
    %139 = vector.load %arg17[%c0_84, %c0_85] : memref<8x32xf32, #tpu.memory_space<vmem>>, vector<8x32xf32>
    tpu.vector_store %arg17[%c0_84, %c0_85], %136 {strides = array<i32>} : memref<8x32xf32, #tpu.memory_space<vmem>>, vector<8x32xf32>,
    %c0_86 = arith.constant 0 : index
    %c0_87 = arith.constant 0 : index
    %140 = vector.load %arg16[%c0_86, %c0_87] : memref<8x32xf32, #tpu.memory_space<vmem>>, vector<8x32xf32>
    tpu.vector_store %arg16[%c0_86, %c0_87], %138 {strides = array<i32>} : memref<8x32xf32, #tpu.memory_space<vmem>>, vector<8x32xf32>,
    %141 = arith.index_cast %114 : i32 to index
    %c0_88 = arith.constant 0 : index
    %142 = vector.load %arg15[%141, %c0_88] : memref<16x32xf32, #tpu.memory_space<vmem>>, vector<8x32xf32>
    tpu.vector_store %arg15[%141, %c0_88], %138 {strides = array<i32>} : memref<16x32xf32, #tpu.memory_space<vmem>>, vector<8x32xf32>,
    %c2_i32_89 = arith.constant 2 : i32
    %c0_90 = arith.constant 0 : index
    %c0_91 = arith.constant 0 : index
    %143 = vector.load %arg15[%c0_90, %c0_91] : memref<16x32xf32, #tpu.memory_space<vmem>>, vector<16x32xf32>
    %144 = arith.truncf %143 : vector<16x32xf32> to vector<16x32xbf16>
    %c0_92 = arith.constant 0 : index
    %c0_93 = arith.constant 0 : index
    %145 = vector.load %arg7[%c0_92, %c0_93] : memref<32x128xbf16, #tpu.memory_space<vmem>>, vector<32x128xbf16>
    %cst_94 = arith.constant dense<0.000000e+00> : vector<16x128xf32>
    %146 = tpu.matmul %144, %145, %cst_94 {dimension_numbers = #tpu.dot_dimension_numbers<[1], [0], [0], [1], [0, 0, 1, 1], [], []>} : vector<16x32xbf16>, vector<32x128xbf16>, vector<16x128xf32> -> vector<16x128xf32>
    %c0_95 = arith.constant 0 : index
    %c0_96 = arith.constant 0 : index
    %147 = vector.load %arg8[%c0_95, %c0_96] : memref<1x128xf32, #tpu.memory_space<vmem>>, vector<1x128xf32>
    %148 = vector.broadcast %147 : vector<1x128xf32> to vector<16x128xf32>
    %149 = arith.addf %146, %148 : vector<16x128xf32>
    %c0_97 = arith.constant 0 : index
    %c0_98 = arith.constant 0 : index
    %150 = vector.load %arg9[%c0_97, %c0_98] : memref<2x128xf32, #tpu.memory_space<vmem>>, vector<2x128xf32>
    %151 = arith.truncf %149 : vector<16x128xf32> to vector<16x128xbf16>
    %c0_99 = arith.constant 0 : index
    %c0_100 = arith.constant 0 : index
    %152 = vector.load %arg10[%c0_99, %c0_100] : memref<128x128xbf16, #tpu.memory_space<vmem>>, vector<128x128xbf16>
    %cst_101 = arith.constant dense<0.000000e+00> : vector<16x128xf32>
    %153 = tpu.matmul %151, %152, %cst_101 {dimension_numbers = #tpu.dot_dimension_numbers<[1], [0], [0], [1], [0, 0, 1, 1], [], []>} : vector<16x128xbf16>, vector<128x128xbf16>, vector<16x128xf32> -> vector<16x128xf32>
    %c0_102 = arith.constant 0 : index
    %c0_103 = arith.constant 0 : index
    %154 = vector.load %arg11[%c0_102, %c0_103] : memref<1x128xf32, #tpu.memory_space<vmem>>, vector<1x128xf32>
    %155 = vector.broadcast %154 : vector<1x128xf32> to vector<16x128xf32>
    %156 = arith.addf %153, %155 : vector<16x128xf32>
    %157 = math.tanh %156 : vector<16x128xf32>
    %158 = arith.truncf %150 : vector<2x128xf32> to vector<2x128xbf16>
    %c0_104 = arith.constant 0 : index
    %c0_105 = arith.constant 0 : index
    %159 = vector.load %arg10[%c0_104, %c0_105] : memref<128x128xbf16, #tpu.memory_space<vmem>>, vector<128x128xbf16>
    %cst_106 = arith.constant dense<0.000000e+00> : vector<2x128xf32>
    %160 = tpu.matmul %158, %159, %cst_106 {dimension_numbers = #tpu.dot_dimension_numbers<[1], [0], [0], [1], [0, 0, 1, 1], [], []>} : vector<2x128xbf16>, vector<128x128xbf16>, vector<2x128xf32> -> vector<2x128xf32>
    %c0_107 = arith.constant 0 : index
    %c0_108 = arith.constant 0 : index
    %161 = vector.load %arg11[%c0_107, %c0_108] : memref<1x128xf32, #tpu.memory_space<vmem>>, vector<1x128xf32>
    %162 = vector.broadcast %161 : vector<1x128xf32> to vector<2x128xf32>
    %163 = arith.addf %160, %162 : vector<2x128xf32>
    %164 = math.tanh %163 : vector<2x128xf32>
    %c0_109 = arith.constant 0 : index
    %c0_110 = arith.constant 0 : index
    %165 = vector.load %arg12[%c0_109, %c0_110] : memref<16x128xf32, #tpu.memory_space<vmem>>, vector<16x128xf32>
    tpu.vector_store %arg12[%c0_109, %c0_110], %157 {strides = array<i32>} : memref<16x128xf32, #tpu.memory_space<vmem>>, vector<16x128xf32>,
    %c0_111 = arith.constant 0 : index
    %c0_112 = arith.constant 0 : index
    %166 = vector.load %arg13[%c0_111, %c0_112] : memref<2x128xf32, #tpu.memory_space<vmem>>, vector<2x128xf32>
    tpu.vector_store %arg13[%c0_111, %c0_112], %164 {strides = array<i32>} : memref<2x128xf32, #tpu.memory_space<vmem>>, vector<2x128xf32>,
    return
  }
}

</mosaic_0001>

<llo_original>
// kernel: tpu_custom_call.1
$region0: #{tpu_custom_call.1}
  #allocation0 [shape = 'u32[]', space=smem, size = 0x4, offset = 0x4, fixed_abs, tag = 'smem constant byte address 0x4 - core index']
  #allocation1 [shape = 'u32[144,128]{1,0:T(1,128)}', space=vmem, size = 0x12000, scoped, tag = 'internal scratch']
  #allocation2 [shape = 'f32[16,128]{1,0:T(8,128)}', space=vmem, size = 0x2000, scoped, tag = 'scratch operand']
  #allocation3 [shape = 'f32[16,32]{1,0:T(8,128)}', space=vmem, size = 0x2000, scoped, tag = 'scratch operand']
  #allocation4 [shape = 'f32[8,32]{1,0:T(8,128)}', space=vmem, size = 0x1000, scoped, tag = 'scratch operand']
  #allocation5 [shape = 'f32[8,32]{1,0:T(8,128)}', space=vmem, size = 0x1000, scoped, tag = 'scratch operand']
  %s0 = inlined_call_operand.hbm [shape: bf16[16,16], index: 0, kind: input, shape index: {}]
  %s1 = inlined_call_operand.hbm [shape: bf16[16,128], index: 1, kind: input, shape index: {}]
  %s2 = inlined_call_operand.hbm [shape: bf16[32,128], index: 2, kind: input, shape index: {}]
  %s3 = inlined_call_operand.vmem [shape: f32[1,128], index: 3, kind: input, shape index: {}]
  %s4 = inlined_call_operand.hbm [shape: bf16[32,128], index: 4, kind: input, shape index: {}]
  %s5 = inlined_call_operand.hbm [shape: bf16[32,128], index: 5, kind: input, shape index: {}]
  %s6 = inlined_call_operand.vmem [shape: f32[1,128], index: 6, kind: input, shape index: {}]
  %s7 = inlined_call_operand.hbm [shape: bf16[32,128], index: 7, kind: input, shape index: {}]
  %s8 = inlined_call_operand.vmem [shape: f32[1,128], index: 8, kind: input, shape index: {}]
  %s9 = inlined_call_operand.vmem [shape: f32[2,128], index: 9, kind: input, shape index: {}]
  %s10 = inlined_call_operand.hbm [shape: bf16[128,128], index: 10, kind: input, shape index: {}]
  %s11 = inlined_call_operand.vmem [shape: f32[1,128], index: 11, kind: input, shape index: {}]
  %s12 = inlined_call_operand.hbm [shape: f32[16,128], index: 12, kind: output, shape index: {0}]
  %s13 = inlined_call_operand.hbm [shape: f32[2,128], index: 13, kind: output, shape index: {1}]
  %14 = xla_tuple %s12, %s13
  %s15 = sld [smem:[#allocation0]]
  $region94: #{tpu_custom_call.1} parent=0
    _
  %s17 = ssub.s32 1, %s15
  %s18 = scalar_select 0, %s17, %s15
  $region1: #{tpu_custom_call.1} parent=0
    #allocation6 [shape = 'u8[4096]{0}', space=vmem, size = 0x1000, scoped, tag = 'input window, operand 0, single buffered']
    #allocation7 [shape = 's32[1]{0}', space=sflag, size = 0x4, scoped, tag = 'scoped memory for tpu_custom_call.1']
    #allocation8 [shape = 's32[1]{0}', space=sflag, size = 0x4, scoped, tag = 'scoped memory for tpu_custom_call.1']
    #allocation9 [shape = 'u8[4096]{0}', space=vmem, size = 0x1000, scoped, tag = 'input window, operand 1, single buffered']
    #allocation10 [shape = 's32[1]{0}', space=sflag, size = 0x4, scoped, tag = 'scoped memory for tpu_custom_call.1']
    #allocation11 [shape = 'u8[8192]{0}', space=vmem, size = 0x2000, scoped, tag = 'input window, operand 2, single buffered']
    #allocation12 [shape = 'u8[8192]{0}', space=vmem, size = 0x2000, scoped, tag = 'input window, operand 4, single buffered']
    #allocation13 [shape = 's32[1]{0}', space=sflag, size = 0x4, scoped, tag = 'scoped memory for tpu_custom_call.1']
    #allocation14 [shape = 'u8[8192]{0}', space=vmem, size = 0x2000, scoped, tag = 'input window, operand 5, single buffered']
    #allocation15 [shape = 'u8[8192]{0}', space=vmem, size = 0x2000, scoped, tag = 'input window, operand 7, single buffered']
    #allocation16 [shape = 's32[1]{0}', space=sflag, size = 0x4, scoped, tag = 'scoped memory for tpu_custom_call.1']
    #allocation17 [shape = 'u8[32768]{0}', space=vmem, size = 0x8000, scoped, tag = 'input window, operand 10, single buffered']
    #allocation18 [shape = 'u8[8192]{0}', space=vmem, size = 0x2000, scoped, tag = 'output window, operand 0, single buffered']
    #allocation19 [shape = 'u8[1024]{0}', space=vmem, size = 0x400, scoped, tag = 'output window, operand 1, single buffered']
    #allocation20 [shape = 's32[1]{0}', space=sflag, size = 0x4, scoped, tag = 'scoped memory for tpu_custom_call.1']
    %19 = vsyncpa [#allocation7], 0
    %20 = vsyncpa [#allocation10], 0
    %21 = vsyncpa [#allocation13], 0
    %22 = vsyncpa [#allocation16], 0
    %23 = vsyncpa [#allocation8], 0
    %24 = vsyncpa [#allocation20], 0
    // Predicated region
    $region2: #{tpu_custom_call.1} parent=1 // pred_check
      _
    $region3: #{tpu_custom_call.1} parent=1 // pred_check_branch
      %26 = sbr.rel (0) target = $region5
    $region4: #{tpu_custom_call.1} parent=1 // pred_region
      %s28 = ssub.s32 128, 128
      %29 = vsyncadd [#allocation7], %s28
      %s30 = sshll.u32 [#allocation6], 4
      %s31 = int_to_ptr.vmem [resolvable:$true] %s30
      %36 = dma.hbm_to_vmem [thread:$0]  %s0, 128, %s31, [#allocation7], 64, 64, 4
    $region5: #{tpu_custom_call.1} parent=1 // pred_fallthru
      _
    // Predicated region
    $region6: #{tpu_custom_call.1} parent=1 // pred_check
      _
    $region7: #{tpu_custom_call.1} parent=1 // pred_check_branch
      %38 = sbr.rel (0) target = $region9
    $region8: #{tpu_custom_call.1} parent=1 // pred_region
      %s40 = ssub.s32 128, 128
      %41 = vsyncadd [#allocation10], %s40
      %s42 = sshll.u32 [#allocation9], 4
      %s43 = int_to_ptr.vmem [resolvable:$true] %s42
      %48 = dma.hbm_to_vmem [thread:$0]  %s1, 128, %s43, [#allocation10], 64, 64, 4
    $region9: #{tpu_custom_call.1} parent=1 // pred_fallthru
      _
    // Predicated region
    $region10: #{tpu_custom_call.1} parent=1 // pred_check
      _
    $region11: #{tpu_custom_call.1} parent=1 // pred_check_branch
      %50 = sbr.rel (0) target = $region13
    $region12: #{tpu_custom_call.1} parent=1 // pred_region
      %s52 = ssub.s32 256, 256
      %53 = vsyncadd [#allocation10], %s52
      %s54 = sshll.u32 [#allocation11], 4
      %s55 = int_to_ptr.vmem [resolvable:$true] %s54
      %60 = dma.hbm_to_vmem [thread:$0]  %s2, 256, %s55, [#allocation10], 64, 64, 4
    $region13: #{tpu_custom_call.1} parent=1 // pred_fallthru
      _
    // Predicated region
    $region14: #{tpu_custom_call.1} parent=1 // pred_check
      _
    $region15: #{tpu_custom_call.1} parent=1 // pred_check_branch
      %62 = sbr.rel (0) target = $region17
    $region16: #{tpu_custom_call.1} parent=1 // pred_region
      _
    $region17: #{tpu_custom_call.1} parent=1 // pred_fallthru
      _
    // Predicated region
    $region18: #{tpu_custom_call.1} parent=1 // pred_check
      _
    $region19: #{tpu_custom_call.1} parent=1 // pred_check_branch
      %64 = sbr.rel (0) target = $region21
    $region20: #{tpu_custom_call.1} parent=1 // pred_region
      %s66 = ssub.s32 256, 256
      %67 = vsyncadd [#allocation13], %s66
      %s68 = sshll.u32 [#allocation12], 4
      %s69 = int_to_ptr.vmem [resolvable:$true] %s68
      %74 = dma.hbm_to_vmem [thread:$0]  %s4, 256, %s69, [#allocation13], 64, 64, 4
    $region21: #{tpu_custom_call.1} parent=1 // pred_fallthru
      _
    // Predicated region
    $region22: #{tpu_custom_call.1} parent=1 // pred_check
      _
    $region23: #{tpu_custom_call.1} parent=1 // pred_check_branch
      %76 = sbr.rel (0) target = $region25
    $region24: #{tpu_custom_call.1} parent=1 // pred_region
      %s78 = ssub.s32 256, 256
      %79 = vsyncadd [#allocation13], %s78
      %s80 = sshll.u32 [#allocation14], 4
      %s81 = int_to_ptr.vmem [resolvable:$true] %s80
      %86 = dma.hbm_to_vmem [thread:$0]  %s5, 256, %s81, [#allocation13], 64, 64, 4
    $region25: #{tpu_custom_call.1} parent=1 // pred_fallthru
      _
    // Predicated region
    $region26: #{tpu_custom_call.1} parent=1 // pred_check
      _
    $region27: #{tpu_custom_call.1} parent=1 // pred_check_branch
      %88 = sbr.rel (0) target = $region29
    $region28: #{tpu_custom_call.1} parent=1 // pred_region
      _
    $region29: #{tpu_custom_call.1} parent=1 // pred_fallthru
      _
    // Predicated region
    $region30: #{tpu_custom_call.1} parent=1 // pred_check
      _
    $region31: #{tpu_custom_call.1} parent=1 // pred_check_branch
      %90 = sbr.rel (0) target = $region33
    $region32: #{tpu_custom_call.1} parent=1 // pred_region
      %s92 = ssub.s32 256, 256
      %93 = vsyncadd [#allocation16], %s92
      %s94 = sshll.u32 [#allocation15], 4
      %s95 = int_to_ptr.vmem [resolvable:$true] %s94
      %100 = dma.hbm_to_vmem [thread:$0]  %s7, 256, %s95, [#allocation16], 64, 64, 4
    $region33: #{tpu_custom_call.1} parent=1 // pred_fallthru
      _
    // Predicated region
    $region34: #{tpu_custom_call.1} parent=1 // pred_check
      _
    $region35: #{tpu_custom_call.1} parent=1 // pred_check_branch
      %102 = sbr.rel (0) target = $region37
    $region36: #{tpu_custom_call.1} parent=1 // pred_region
      _
    $region37: #{tpu_custom_call.1} parent=1 // pred_fallthru
      _
    // Predicated region
    $region38: #{tpu_custom_call.1} parent=1 // pred_check
      _
    $region39: #{tpu_custom_call.1} parent=1 // pred_check_branch
      %104 = sbr.rel (0) target = $region41
    $region40: #{tpu_custom_call.1} parent=1 // pred_region
      _
    $region41: #{tpu_custom_call.1} parent=1 // pred_fallthru
      _
    // Predicated region
    $region42: #{tpu_custom_call.1} parent=1 // pred_check
      _
    $region43: #{tpu_custom_call.1} parent=1 // pred_check_branch
      %106 = sbr.rel (0) target = $region45
    $region44: #{tpu_custom_call.1} parent=1 // pred_region
      %s108 = ssub.s32 1024, 1024
      %109 = vsyncadd [#allocation16], %s108
      %s110 = sshll.u32 [#allocation17], 4
      %s111 = int_to_ptr.vmem [resolvable:$true] %s110
      %116 = dma.hbm_to_vmem [thread:$0]  %s10, 1024, %s111, [#allocation16], 64, 64, 4
    $region45: #{tpu_custom_call.1} parent=1 // pred_fallthru
      _
    // Predicated region
    $region46: #{tpu_custom_call.1} parent=1 // pred_check
      _
    $region47: #{tpu_custom_call.1} parent=1 // pred_check_branch
      %118 = sbr.rel (0) target = $region49
    $region48: #{tpu_custom_call.1} parent=1 // pred_region
      _
    $region49: #{tpu_custom_call.1} parent=1 // pred_fallthru
      _
    // Predicated region
    $region50: #{tpu_custom_call.1} parent=1 // pred_check
      _
    $region51: #{tpu_custom_call.1} parent=1 // pred_check_branch
      %120 = sbr.rel (0) target = $region53
    $region52: #{tpu_custom_call.1} parent=1 // pred_region
      %121 = dma.done [#allocation7], 128
    $region53: #{tpu_custom_call.1} parent=1 // pred_fallthru
      _
    // Predicated region
    $region54: #{tpu_custom_call.1} parent=1 // pred_check
      _
    $region55: #{tpu_custom_call.1} parent=1 // pred_check_branch
      %123 = sbr.rel (0) target = $region57
    $region56: #{tpu_custom_call.1} parent=1 // pred_region
      %124 = dma.done [#allocation10], 128
    $region57: #{tpu_custom_call.1} parent=1 // pred_fallthru
      _
    // Predicated region
    $region58: #{tpu_custom_call.1} parent=1 // pred_check
      _
    $region59: #{tpu_custom_call.1} parent=1 // pred_check_branch
      %126 = sbr.rel (0) target = $region61
    $region60: #{tpu_custom_call.1} parent=1 // pred_region
      %127 = dma.done [#allocation10], 256
    $region61: #{tpu_custom_call.1} parent=1 // pred_fallthru
      _
    // Predicated region
    $region62: #{tpu_custom_call.1} parent=1 // pred_check
      _
    $region63: #{tpu_custom_call.1} parent=1 // pred_check_branch
      %129 = sbr.rel (0) target = $region65
    $region64: #{tpu_custom_call.1} parent=1 // pred_region
      %130 = dma.done [#allocation13], 256
    $region65: #{tpu_custom_call.1} parent=1 // pred_fallthru
      _
    // Predicated region
    $region66: #{tpu_custom_call.1} parent=1 // pred_check
      _
    $region67: #{tpu_custom_call.1} parent=1 // pred_check_branch
      %132 = sbr.rel (0) target = $region69
    $region68: #{tpu_custom_call.1} parent=1 // pred_region
      %133 = dma.done [#allocation13], 256
    $region69: #{tpu_custom_call.1} parent=1 // pred_fallthru
      _
    // Predicated region
    $region70: #{tpu_custom_call.1} parent=1 // pred_check
      _
    $region71: #{tpu_custom_call.1} parent=1 // pred_check_branch
      %135 = sbr.rel (0) target = $region73
    $region72: #{tpu_custom_call.1} parent=1 // pred_region
      %136 = dma.done [#allocation16], 256
    $region73: #{tpu_custom_call.1} parent=1 // pred_fallthru
      _
    // Predicated region
    $region74: #{tpu_custom_call.1} parent=1 // pred_check
      _
    $region75: #{tpu_custom_call.1} parent=1 // pred_check_branch
      %138 = sbr.rel (0) target = $region77
    $region76: #{tpu_custom_call.1} parent=1 // pred_region
      %139 = dma.done [#allocation16], 1024
    $region77: #{tpu_custom_call.1} parent=1 // pred_fallthru
      _
    %v141 = vld [vmem:[#allocation6] sm:$0xf]
    %v142 = vld [vmem:[#allocation6 + $0x4] sm:$0xf]
    %v143 = vld [vmem:[#allocation9] sm:$0xf]
    %v144 = vld [vmem:[#allocation9 + $0x4] sm:$0xf]
    %v145 = vld [vmem:[%s3] sm:$0x1]
    %v147 = vlaneseq
    %v148 = vshrl.u32 %v147, 7
    %v149 = vsub.s32 0, %v148
    %v150 = vrot.slane %v145, %v149
    %v154 = vunpack.c.l.b16 %v141
    %v155 = vunpack.c.l.b16 %v142
    %v156 = vpack.c.b16 %v155, %v154
    %v159 = vunpack.c.l.b16 %v143
    %v160 = vunpack.c.l.b16 %v144
    %v161 = vpack.c.b16 %v160, %v159
    %vm163 = vcmask 130048
    %v165 = vsel %vm163, %v156, 0
    %167 = vmatprep.subr.bf16.mxu0 0
    %168 = vmatpush1.bf16.msra.mxu0 0
    %169 = vmatprep.subr.bf16.mxu0 0
    %170 = vmatpush1.bf16.msra.mxu0 0
    %171 = vmatprep.subr.bf16.mxu0 0
    %172 = vmatpush1.bf16.msra.mxu0 0
    %173 = vmatprep.subr.bf16.mxu0 0
    %174 = vmatpush1.bf16.msra.mxu0 0
    %175 = vmatprep.subr.bf16.mxu0 0
    %176 = vmatpush1.bf16.msra.mxu0 0
    %177 = vmatprep.subr.bf16.mxu0 0
    %178 = vmatpush1.bf16.msra.mxu0 0
    %179 = vmatprep.subr.bf16.mxu0 0
    %180 = vmatpush1.bf16.msra.mxu0 0
    %181 = vmatprep.subr.bf16.mxu0 0
    %182 = vmatpush1.bf16.msra.mxu0 %v161
    %183 = vmatprep.subr.bf16.mxu0 0
    %184 = vmatpush2.bf16.msra.mxu0 0
    %185 = vmatprep.subr.bf16.mxu0 0
    %186 = vmatpush2.bf16.msra.mxu0 0
    %187 = vmatprep.subr.bf16.mxu0 0
    %188 = vmatpush2.bf16.msra.mxu0 0
    %189 = vmatprep.subr.bf16.mxu0 0
    %190 = vmatpush2.bf16.msra.mxu0 0
    %191 = vmatprep.subr.bf16.mxu0 0
    %192 = vmatpush2.bf16.msra.mxu0 0
    %193 = vmatprep.subr.bf16.mxu0 0
    %194 = vmatpush2.bf16.msra.mxu0 0
    %195 = vmatprep.subr.bf16.mxu0 0
    %196 = vmatpush2.bf16.msra.mxu0 0
    %197 = vmatprep.subr.bf16.mxu0 0
    %198 = vmatpush2.bf16.msra.mxu0 0
    %199 = vmatprep.mubr.bf16.mxu0 0
    %200 = vmatmul.mubr.bf16.gmra.mxu0 %v165
    %v201 = vpop.f32.mrf.mxu0
    %v202 = vadd.f32 %v150, %v201
    %v203 = vpop.f32.mrf.mxu0
    %v204 = vpop.f32.mrf.mxu0
    %v205 = vadd.f32 %v150, %v204
    %v206 = vpop.f32.mrf.mxu0
    %207 = vdwg.mxu0
    %208 = vst [vmem:[#allocation2] sm:$0xff] %v202
    %209 = vst [vmem:[#allocation2 + $0x8] sm:$0xff] %v205
    %vm210 = vcmask 261120
    %211 = vst.msk [vmem:[#allocation4] sm:$0xff] %vm210, 0.0
    %212 = vst.msk [vmem:[#allocation5] sm:$0xff] %vm210, 0.0
    %v213 = vld [vmem:[#allocation2] sm:$0xff]
    %v214 = vld [vmem:[#allocation4] sm:$0xff]
    %v215 = vpack.c.bf16 %v214, %v214
    %v216 = vld [vmem:[#allocation11] sm:$0xf]
    %v217 = vld [vmem:[#allocation11 + $0x4] sm:$0xf]
    %v218 = vld [vmem:[#allocation11 + $0x8] sm:$0xf]
    %v219 = vld [vmem:[#allocation11 + $0xc] sm:$0xf]
    %v224 = vunpack.c.l.b16 %v216
    %v225 = vunpack.c.l.b16 %v217
    %v226 = vunpack.c.l.b16 %v218
    %v227 = vunpack.c.l.b16 %v219
    %v228 = vpack.c.b16 %v225, %v224
    %v229 = vpack.c.b16 %v227, %v226
    %v233 = vsel %vm210, %v215, 0
    %235 = vmatprep.subr.bf16.mxu0 0
    %236 = vmatpush1.bf16.msra.mxu0 0
    %237 = vmatprep.subr.bf16.mxu0 0
    %238 = vmatpush1.bf16.msra.mxu0 0
    %239 = vmatprep.subr.bf16.mxu0 0
    %240 = vmatpush1.bf16.msra.mxu0 0
    %241 = vmatprep.subr.bf16.mxu0 0
    %242 = vmatpush1.bf16.msra.mxu0 0
    %243 = vmatprep.subr.bf16.mxu0 0
    %244 = vmatpush1.bf16.msra.mxu0 0
    %245 = vmatprep.subr.bf16.mxu0 0
    %246 = vmatpush1.bf16.msra.mxu0 0
    %247 = vmatprep.subr.bf16.mxu0 0
    %248 = vmatpush1.bf16.msra.mxu0 %v229
    %249 = vmatprep.subr.bf16.mxu0 0
    %250 = vmatpush1.bf16.msra.mxu0 %v228
    %251 = vmatprep.subr.bf16.mxu0 0
    %252 = vmatpush2.bf16.msra.mxu0 0
    %253 = vmatprep.subr.bf16.mxu0 0
    %254 = vmatpush2.bf16.msra.mxu0 0
    %255 = vmatprep.subr.bf16.mxu0 0
    %256 = vmatpush2.bf16.msra.mxu0 0
    %257 = vmatprep.subr.bf16.mxu0 0
    %258 = vmatpush2.bf16.msra.mxu0 0
    %259 = vmatprep.subr.bf16.mxu0 0
    %260 = vmatpush2.bf16.msra.mxu0 0
    %261 = vmatprep.subr.bf16.mxu0 0
    %262 = vmatpush2.bf16.msra.mxu0 0
    %263 = vmatprep.subr.bf16.mxu0 0
    %264 = vmatpush2.bf16.msra.mxu0 0
    %265 = vmatprep.subr.bf16.mxu0 0
    %266 = vmatpush2.bf16.msra.mxu0 0
    %267 = vmatprep.mubr.bf16.mxu0 0
    %268 = vmatmul.mubr.bf16.gmra.mxu0 %v233
    %v269 = vpop.f32.mrf.mxu0
    %v270 = vadd.f32 0.0, %v269
    %v271 = vpop.f32.mrf.mxu0
    %v272 = vpop.f32.mrf.mxu0
    %v273 = vpop.f32.mrf.mxu0
    %274 = vdwg.mxu0
    %v275 = vadd.f32 %v213, %v270
    %v276 = vxor.u32 %v275, 2147483648
    %v277 = vmul.f32 %v276, 1.442695
    %v278 = vpow.pop %v277
    %v279 = vadd.f32 %v278, 1.0
    %v280 = vrcp.pop %v279
    %v281 = vmul.f32 1.0, %v280
    %v282 = vtanh.pop %v275
    %v283 = vld [vmem:[#allocation5] sm:$0xff]
    %285 = vrot.lane.b32.xlu0 %v283, 32
    %v286 = vpop.permute.xlu0 %285
    %v288 = vmul.f32 %v281, %v286
    %290 = vrot.lane.b32.xlu0 %v282, 32
    %v291 = vpop.permute.xlu0 %290
    %v293 = vmul.f32 %v281, %v291
    %295 = vrot.lane.b32.xlu0 %v293, 32
    %v296 = vpop.permute.xlu0 %295
    %v298 = vadd.f32 %v288, %v296
    %v299 = vtanh.pop %v298
    %301 = vrot.lane.b32.xlu0 %v299, 32
    %v302 = vpop.permute.xlu0 %301
    %v304 = vmul.f32 %v281, %v302
    %306 = vrot.lane.b32.xlu0 %v298, 96
    %v307 = vpop.permute.xlu0 %306
    %309 = vst.msk [vmem:[#allocation5] sm:$0xff] %vm210, %v307
    %311 = vrot.lane.b32.xlu0 %v304, 64
    %v312 = vpop.permute.xlu0 %311
    %314 = vst.msk [vmem:[#allocation4] sm:$0xff] %vm210, %v312
    %315 = vst.msk [vmem:[#allocation3] sm:$0xff] %vm210, %v312
    %s316 = scalar_lea.vmem [#allocation2], 8
    %v317 = vld [vmem:[%s316] sm:$0xff]
    %v318 = vld [vmem:[#allocation4] sm:$0xff]
    %v319 = vpack.c.bf16 %v318, %v318
    %v320 = vld [vmem:[#allocation11] sm:$0xf]
    %v321 = vld [vmem:[#allocation11 + $0x4] sm:$0xf]
    %v322 = vld [vmem:[#allocation11 + $0x8] sm:$0xf]
    %v323 = vld [vmem:[#allocation11 + $0xc] sm:$0xf]
    %v328 = vunpack.c.l.b16 %v320
    %v329 = vunpack.c.l.b16 %v321
    %v330 = vunpack.c.l.b16 %v322
    %v331 = vunpack.c.l.b16 %v323
    %v332 = vpack.c.b16 %v329, %v328
    %v333 = vpack.c.b16 %v331, %v330
    %v337 = vsel %vm210, %v319, 0
    %339 = vmatprep.subr.bf16.mxu0 0
    %340 = vmatpush1.bf16.msra.mxu0 0
    %341 = vmatprep.subr.bf16.mxu0 0
    %342 = vmatpush1.bf16.msra.mxu0 0
    %343 = vmatprep.subr.bf16.mxu0 0
    %344 = vmatpush1.bf16.msra.mxu0 0
    %345 = vmatprep.subr.bf16.mxu0 0
    %346 = vmatpush1.bf16.msra.mxu0 0
    %347 = vmatprep.subr.bf16.mxu0 0
    %348 = vmatpush1.bf16.msra.mxu0 0
    %349 = vmatprep.subr.bf16.mxu0 0
    %350 = vmatpush1.bf16.msra.mxu0 0
    %351 = vmatprep.subr.bf16.mxu0 0
    %352 = vmatpush1.bf16.msra.mxu0 %v333
    %353 = vmatprep.subr.bf16.mxu0 0
    %354 = vmatpush1.bf16.msra.mxu0 %v332
    %355 = vmatprep.subr.bf16.mxu0 0
    %356 = vmatpush2.bf16.msra.mxu0 0
    %357 = vmatprep.subr.bf16.mxu0 0
    %358 = vmatpush2.bf16.msra.mxu0 0
    %359 = vmatprep.subr.bf16.mxu0 0
    %360 = vmatpush2.bf16.msra.mxu0 0
    %361 = vmatprep.subr.bf16.mxu0 0
    %362 = vmatpush2.bf16.msra.mxu0 0
    %363 = vmatprep.subr.bf16.mxu0 0
    %364 = vmatpush2.bf16.msra.mxu0 0
    %365 = vmatprep.subr.bf16.mxu0 0
    %366 = vmatpush2.bf16.msra.mxu0 0
    %367 = vmatprep.subr.bf16.mxu0 0
    %368 = vmatpush2.bf16.msra.mxu0 0
    %369 = vmatprep.subr.bf16.mxu0 0
    %370 = vmatpush2.bf16.msra.mxu0 0
    %371 = vmatprep.mubr.bf16.mxu0 0
    %372 = vmatmul.mubr.bf16.gmra.mxu0 %v337
    %v373 = vpop.f32.mrf.mxu0
    %v374 = vadd.f32 0.0, %v373
    %v375 = vpop.f32.mrf.mxu0
    %v376 = vpop.f32.mrf.mxu0
    %v377 = vpop.f32.mrf.mxu0
    %378 = vdwg.mxu0
    %v379 = vadd.f32 %v317, %v374
    %v380 = vxor.u32 %v379, 2147483648
    %v381 = vmul.f32 %v380, 1.442695
    %v382 = vpow.pop %v381
    %v383 = vadd.f32 %v382, 1.0
    %v384 = vrcp.pop %v383
    %v385 = vmul.f32 1.0, %v384
    %v386 = vtanh.pop %v379
    %v387 = vld [vmem:[#allocation5] sm:$0xff]
    %389 = vrot.lane.b32.xlu0 %v387, 32
    %v390 = vpop.permute.xlu0 %389
    %v392 = vmul.f32 %v385, %v390
    %394 = vrot.lane.b32.xlu0 %v386, 32
    %v395 = vpop.permute.xlu0 %394
    %v397 = vmul.f32 %v385, %v395
    %399 = vrot.lane.b32.xlu0 %v397, 32
    %v400 = vpop.permute.xlu0 %399
    %v402 = vadd.f32 %v392, %v400
    %v403 = vtanh.pop %v402
    %405 = vrot.lane.b32.xlu0 %v403, 32
    %v406 = vpop.permute.xlu0 %405
    %v408 = vmul.f32 %v385, %v406
    %410 = vrot.lane.b32.xlu0 %v402, 96
    %v411 = vpop.permute.xlu0 %410
    %413 = vst.msk [vmem:[#allocation5] sm:$0xff] %vm210, %v411
    %415 = vrot.lane.b32.xlu0 %v408, 64
    %v416 = vpop.permute.xlu0 %415
    %418 = vst.msk [vmem:[#allocation4] sm:$0xff] %vm210, %v416
    %s419 = scalar_lea.vmem [#allocation3], 8
    %420 = vst.msk [vmem:[%s419] sm:$0xff] %vm210, %v416
    %v421 = vld [vmem:[#allocation3] sm:$0xff]
    %v422 = vld [vmem:[#allocation3 + $0x8] sm:$0xff]
    %v423 = vpack.c.bf16 %v422, %v421
    %v424 = vld [vmem:[#allocation12] sm:$0xf]
    %v425 = vld [vmem:[#allocation12 + $0x4] sm:$0xf]
    %v426 = vld [vmem:[#allocation12 + $0x8] sm:$0xf]
    %v427 = vld [vmem:[#allocation12 + $0xc] sm:$0xf]
    %v428 = vld [vmem:[%s6] sm:$0x1]
    %v430 = vlaneseq
    %v431 = vshrl.u32 %v430, 7
    %v432 = vsub.s32 0, %v431
    %v433 = vrot.slane %v428, %v432
    %v439 = vunpack.c.l.b16 %v424
    %v440 = vunpack.c.l.b16 %v425
    %v441 = vunpack.c.l.b16 %v426
    %v442 = vunpack.c.l.b16 %v427
    %v443 = vpack.c.b16 %v440, %v439
    %v444 = vpack.c.b16 %v442, %v441
    %v448 = vsel %vm210, %v423, 0
    %450 = vmatprep.subr.bf16.mxu0 0
    %451 = vmatpush1.bf16.msra.mxu0 0
    %452 = vmatprep.subr.bf16.mxu0 0
    %453 = vmatpush1.bf16.msra.mxu0 0
    %454 = vmatprep.subr.bf16.mxu0 0
    %455 = vmatpush1.bf16.msra.mxu0 0
    %456 = vmatprep.subr.bf16.mxu0 0
    %457 = vmatpush1.bf16.msra.mxu0 0
    %458 = vmatprep.subr.bf16.mxu0 0
    %459 = vmatpush1.bf16.msra.mxu0 0
    %460 = vmatprep.subr.bf16.mxu0 0
    %461 = vmatpush1.bf16.msra.mxu0 0
    %462 = vmatprep.subr.bf16.mxu0 0
    %463 = vmatpush1.bf16.msra.mxu0 %v444
    %464 = vmatprep.subr.bf16.mxu0 0
    %465 = vmatpush1.bf16.msra.mxu0 %v443
    %466 = vmatprep.subr.bf16.mxu0 0
    %467 = vmatpush2.bf16.msra.mxu0 0
    %468 = vmatprep.subr.bf16.mxu0 0
    %469 = vmatpush2.bf16.msra.mxu0 0
    %470 = vmatprep.subr.bf16.mxu0 0
    %471 = vmatpush2.bf16.msra.mxu0 0
    %472 = vmatprep.subr.bf16.mxu0 0
    %473 = vmatpush2.bf16.msra.mxu0 0
    %474 = vmatprep.subr.bf16.mxu0 0
    %475 = vmatpush2.bf16.msra.mxu0 0
    %476 = vmatprep.subr.bf16.mxu0 0
    %477 = vmatpush2.bf16.msra.mxu0 0
    %478 = vmatprep.subr.bf16.mxu0 0
    %479 = vmatpush2.bf16.msra.mxu0 0
    %480 = vmatprep.subr.bf16.mxu0 0
    %481 = vmatpush2.bf16.msra.mxu0 0
    %482 = vmatprep.mubr.bf16.mxu0 0
    %483 = vmatmul.mubr.bf16.gmra.mxu0 %v448
    %v484 = vpop.f32.mrf.mxu0
    %v485 = vadd.f32 %v433, %v484
    %v486 = vpop.f32.mrf.mxu0
    %v487 = vpop.f32.mrf.mxu0
    %v488 = vadd.f32 %v433, %v487
    %v489 = vpop.f32.mrf.mxu0
    %490 = vdwg.mxu0
    %491 = vst [vmem:[#allocation2] sm:$0xff] %v485
    %492 = vst [vmem:[#allocation2 + $0x8] sm:$0xff] %v488
    %493 = vst.msk [vmem:[#allocation4] sm:$0xff] %vm210, 0.0
    %494 = vst.msk [vmem:[#allocation5] sm:$0xff] %vm210, 0.0
    %v495 = vld [vmem:[#allocation2] sm:$0xff]
    %v496 = vld [vmem:[#allocation4] sm:$0xff]
    %v497 = vpack.c.bf16 %v496, %v496
    %v498 = vld [vmem:[#allocation14] sm:$0xf]
    %v499 = vld [vmem:[#allocation14 + $0x4] sm:$0xf]
    %v500 = vld [vmem:[#allocation14 + $0x8] sm:$0xf]
    %v501 = vld [vmem:[#allocation14 + $0xc] sm:$0xf]
    %v506 = vunpack.c.l.b16 %v498
    %v507 = vunpack.c.l.b16 %v499
    %v508 = vunpack.c.l.b16 %v500
    %v509 = vunpack.c.l.b16 %v501
    %v510 = vpack.c.b16 %v507, %v506
    %v511 = vpack.c.b16 %v509, %v508
    %v515 = vsel %vm210, %v497, 0
    %517 = vmatprep.subr.bf16.mxu0 0
    %518 = vmatpush1.bf16.msra.mxu0 0
    %519 = vmatprep.subr.bf16.mxu0 0
    %520 = vmatpush1.bf16.msra.mxu0 0
    %521 = vmatprep.subr.bf16.mxu0 0
    %522 = vmatpush1.bf16.msra.mxu0 0
    %523 = vmatprep.subr.bf16.mxu0 0
    %524 = vmatpush1.bf16.msra.mxu0 0
    %525 = vmatprep.subr.bf16.mxu0 0
    %526 = vmatpush1.bf16.msra.mxu0 0
    %527 = vmatprep.subr.bf16.mxu0 0
    %528 = vmatpush1.bf16.msra.mxu0 0
    %529 = vmatprep.subr.bf16.mxu0 0
    %530 = vmatpush1.bf16.msra.mxu0 %v511
    %531 = vmatprep.subr.bf16.mxu0 0
    %532 = vmatpush1.bf16.msra.mxu0 %v510
    %533 = vmatprep.subr.bf16.mxu0 0
    %534 = vmatpush2.bf16.msra.mxu0 0
    %535 = vmatprep.subr.bf16.mxu0 0
    %536 = vmatpush2.bf16.msra.mxu0 0
    %537 = vmatprep.subr.bf16.mxu0 0
    %538 = vmatpush2.bf16.msra.mxu0 0
    %539 = vmatprep.subr.bf16.mxu0 0
    %540 = vmatpush2.bf16.msra.mxu0 0
    %541 = vmatprep.subr.bf16.mxu0 0
    %542 = vmatpush2.bf16.msra.mxu0 0
    %543 = vmatprep.subr.bf16.mxu0 0
    %544 = vmatpush2.bf16.msra.mxu0 0
    %545 = vmatprep.subr.bf16.mxu0 0
    %546 = vmatpush2.bf16.msra.mxu0 0
    %547 = vmatprep.subr.bf16.mxu0 0
    %548 = vmatpush2.bf16.msra.mxu0 0
    %549 = vmatprep.mubr.bf16.mxu0 0
    %550 = vmatmul.mubr.bf16.gmra.mxu0 %v515
    %v551 = vpop.f32.mrf.mxu0
    %v552 = vadd.f32 0.0, %v551
    %v553 = vpop.f32.mrf.mxu0
    %v554 = vpop.f32.mrf.mxu0
    %v555 = vpop.f32.mrf.mxu0
    %556 = vdwg.mxu0
    %v557 = vadd.f32 %v495, %v552
    %v558 = vxor.u32 %v557, 2147483648
    %v559 = vmul.f32 %v558, 1.442695
    %v560 = vpow.pop %v559
    %v561 = vadd.f32 %v560, 1.0
    %v562 = vrcp.pop %v561
    %v563 = vmul.f32 1.0, %v562
    %v564 = vtanh.pop %v557
    %v565 = vld [vmem:[#allocation5] sm:$0xff]
    %567 = vrot.lane.b32.xlu0 %v565, 32
    %v568 = vpop.permute.xlu0 %567
    %v570 = vmul.f32 %v563, %v568
    %572 = vrot.lane.b32.xlu0 %v564, 32
    %v573 = vpop.permute.xlu0 %572
    %v575 = vmul.f32 %v563, %v573
    %577 = vrot.lane.b32.xlu0 %v575, 32
    %v578 = vpop.permute.xlu0 %577
    %v580 = vadd.f32 %v570, %v578
    %v581 = vtanh.pop %v580
    %583 = vrot.lane.b32.xlu0 %v581, 32
    %v584 = vpop.permute.xlu0 %583
    %v586 = vmul.f32 %v563, %v584
    %588 = vrot.lane.b32.xlu0 %v580, 96
    %v589 = vpop.permute.xlu0 %588
    %591 = vst.msk [vmem:[#allocation5] sm:$0xff] %vm210, %v589
    %593 = vrot.lane.b32.xlu0 %v586, 64
    %v594 = vpop.permute.xlu0 %593
    %596 = vst.msk [vmem:[#allocation4] sm:$0xff] %vm210, %v594
    %597 = vst.msk [vmem:[#allocation3] sm:$0xff] %vm210, %v594
    %v598 = vld [vmem:[%s316] sm:$0xff]
    %v599 = vld [vmem:[#allocation4] sm:$0xff]
    %v600 = vpack.c.bf16 %v599, %v599
    %v601 = vld [vmem:[#allocation14] sm:$0xf]
    %v602 = vld [vmem:[#allocation14 + $0x4] sm:$0xf]
    %v603 = vld [vmem:[#allocation14 + $0x8] sm:$0xf]
    %v604 = vld [vmem:[#allocation14 + $0xc] sm:$0xf]
    %v609 = vunpack.c.l.b16 %v601
    %v610 = vunpack.c.l.b16 %v602
    %v611 = vunpack.c.l.b16 %v603
    %v612 = vunpack.c.l.b16 %v604
    %v613 = vpack.c.b16 %v610, %v609
    %v614 = vpack.c.b16 %v612, %v611
    %v618 = vsel %vm210, %v600, 0
    %620 = vmatprep.subr.bf16.mxu0 0
    %621 = vmatpush1.bf16.msra.mxu0 0
    %622 = vmatprep.subr.bf16.mxu0 0
    %623 = vmatpush1.bf16.msra.mxu0 0
    %624 = vmatprep.subr.bf16.mxu0 0
    %625 = vmatpush1.bf16.msra.mxu0 0
    %626 = vmatprep.subr.bf16.mxu0 0
    %627 = vmatpush1.bf16.msra.mxu0 0
    %628 = vmatprep.subr.bf16.mxu0 0
    %629 = vmatpush1.bf16.msra.mxu0 0
    %630 = vmatprep.subr.bf16.mxu0 0
    %631 = vmatpush1.bf16.msra.mxu0 0
    %632 = vmatprep.subr.bf16.mxu0 0
    %633 = vmatpush1.bf16.msra.mxu0 %v614
    %634 = vmatprep.subr.bf16.mxu0 0
    %635 = vmatpush1.bf16.msra.mxu0 %v613
    %636 = vmatprep.subr.bf16.mxu0 0
    %637 = vmatpush2.bf16.msra.mxu0 0
    %638 = vmatprep.subr.bf16.mxu0 0
    %639 = vmatpush2.bf16.msra.mxu0 0
    %640 = vmatprep.subr.bf16.mxu0 0
    %641 = vmatpush2.bf16.msra.mxu0 0
    %642 = vmatprep.subr.bf16.mxu0 0
    %643 = vmatpush2.bf16.msra.mxu0 0
    %644 = vmatprep.subr.bf16.mxu0 0
    %645 = vmatpush2.bf16.msra.mxu0 0
    %646 = vmatprep.subr.bf16.mxu0 0
    %647 = vmatpush2.bf16.msra.mxu0 0
    %648 = vmatprep.subr.bf16.mxu0 0
    %649 = vmatpush2.bf16.msra.mxu0 0
    %650 = vmatprep.subr.bf16.mxu0 0
    %651 = vmatpush2.bf16.msra.mxu0 0
    %652 = vmatprep.mubr.bf16.mxu0 0
    %653 = vmatmul.mubr.bf16.gmra.mxu0 %v618
    %v654 = vpop.f32.mrf.mxu0
    %v655 = vadd.f32 0.0, %v654
    %v656 = vpop.f32.mrf.mxu0
    %v657 = vpop.f32.mrf.mxu0
    %v658 = vpop.f32.mrf.mxu0
    %659 = vdwg.mxu0
    %v660 = vadd.f32 %v598, %v655
    %v661 = vxor.u32 %v660, 2147483648
    %v662 = vmul.f32 %v661, 1.442695
    %v663 = vpow.pop %v662
    %v664 = vadd.f32 %v663, 1.0
    %v665 = vrcp.pop %v664
    %v666 = vmul.f32 1.0, %v665
    %v667 = vtanh.pop %v660
    %v668 = vld [vmem:[#allocation5] sm:$0xff]
    %670 = vrot.lane.b32.xlu0 %v668, 32
    %v671 = vpop.permute.xlu0 %670
    %v673 = vmul.f32 %v666, %v671
    %675 = vrot.lane.b32.xlu0 %v667, 32
    %v676 = vpop.permute.xlu0 %675
    %v678 = vmul.f32 %v666, %v676
    %680 = vrot.lane.b32.xlu0 %v678, 32
    %v681 = vpop.permute.xlu0 %680
    %v683 = vadd.f32 %v673, %v681
    %v684 = vtanh.pop %v683
    %686 = vrot.lane.b32.xlu0 %v684, 32
    %v687 = vpop.permute.xlu0 %686
    %v689 = vmul.f32 %v666, %v687
    %691 = vrot.lane.b32.xlu0 %v683, 96
    %v692 = vpop.permute.xlu0 %691
    %694 = vst.msk [vmem:[#allocation5] sm:$0xff] %vm210, %v692
    %696 = vrot.lane.b32.xlu0 %v689, 64
    %v697 = vpop.permute.xlu0 %696
    %699 = vst.msk [vmem:[#allocation4] sm:$0xff] %vm210, %v697
    %700 = vst.msk [vmem:[%s419] sm:$0xff] %vm210, %v697
    %v701 = vld [vmem:[#allocation3] sm:$0xff]
    %v702 = vld [vmem:[#allocation3 + $0x8] sm:$0xff]
    %v703 = vpack.c.bf16 %v702, %v701
    %v704 = vld [vmem:[#allocation15] sm:$0xf]
    %v705 = vld [vmem:[#allocation15 + $0x4] sm:$0xf]
    %v706 = vld [vmem:[#allocation15 + $0x8] sm:$0xf]
    %v707 = vld [vmem:[#allocation15 + $0xc] sm:$0xf]
    %v708 = vld [vmem:[%s8] sm:$0x1]
    %v710 = vlaneseq
    %v711 = vshrl.u32 %v710, 7
    %v712 = vsub.s32 0, %v711
    %v713 = vrot.slane %v708, %v712
    %v719 = vunpack.c.l.b16 %v704
    %v720 = vunpack.c.l.b16 %v705
    %v721 = vunpack.c.l.b16 %v706
    %v722 = vunpack.c.l.b16 %v707
    %v723 = vpack.c.b16 %v720, %v719
    %v724 = vpack.c.b16 %v722, %v721
    %v728 = vsel %vm210, %v703, 0
    %730 = vmatprep.subr.bf16.mxu0 0
    %731 = vmatpush1.bf16.msra.mxu0 0
    %732 = vmatprep.subr.bf16.mxu0 0
    %733 = vmatpush1.bf16.msra.mxu0 0
    %734 = vmatprep.subr.bf16.mxu0 0
    %735 = vmatpush1.bf16.msra.mxu0 0
    %736 = vmatprep.subr.bf16.mxu0 0
    %737 = vmatpush1.bf16.msra.mxu0 0
    %738 = vmatprep.subr.bf16.mxu0 0
    %739 = vmatpush1.bf16.msra.mxu0 0
    %740 = vmatprep.subr.bf16.mxu0 0
    %741 = vmatpush1.bf16.msra.mxu0 0
    %742 = vmatprep.subr.bf16.mxu0 0
    %743 = vmatpush1.bf16.msra.mxu0 %v724
    %744 = vmatprep.subr.bf16.mxu0 0
    %745 = vmatpush1.bf16.msra.mxu0 %v723
    %746 = vmatprep.subr.bf16.mxu0 0
    %747 = vmatpush2.bf16.msra.mxu0 0
    %748 = vmatprep.subr.bf16.mxu0 0
    %749 = vmatpush2.bf16.msra.mxu0 0
    %750 = vmatprep.subr.bf16.mxu0 0
    %751 = vmatpush2.bf16.msra.mxu0 0
    %752 = vmatprep.subr.bf16.mxu0 0
    %753 = vmatpush2.bf16.msra.mxu0 0
    %754 = vmatprep.subr.bf16.mxu0 0
    %755 = vmatpush2.bf16.msra.mxu0 0
    %756 = vmatprep.subr.bf16.mxu0 0
    %757 = vmatpush2.bf16.msra.mxu0 0
    %758 = vmatprep.subr.bf16.mxu0 0
    %759 = vmatpush2.bf16.msra.mxu0 0
    %760 = vmatprep.subr.bf16.mxu0 0
    %761 = vmatpush2.bf16.msra.mxu0 0
    %762 = vmatprep.mubr.bf16.mxu0 0
    %763 = vmatmul.mubr.bf16.gmra.mxu0 %v728
    %v764 = vpop.f32.mrf.mxu0
    %v765 = vadd.f32 %v713, %v764
    %v766 = vpop.f32.mrf.mxu0
    %v767 = vpop.f32.mrf.mxu0
    %v768 = vadd.f32 %v713, %v767
    %v769 = vpop.f32.mrf.mxu0
    %770 = vdwg.mxu0
    %v771 = vld [vmem:[%s9] sm:$0x3]
    %v772 = vpack.c.bf16 %v768, %v765
    %v773 = vld [vmem:[#allocation17] sm:$0xf]
    %v774 = vld [vmem:[#allocation17 + $0x4] sm:$0xf]
    %v775 = vld [vmem:[#allocation17 + $0x8] sm:$0xf]
    %v776 = vld [vmem:[#allocation17 + $0xc] sm:$0xf]
    %v777 = vld [vmem:[#allocation17 + $0x10] sm:$0xf]
    %v778 = vld [vmem:[#allocation17 + $0x14] sm:$0xf]
    %v779 = vld [vmem:[#allocation17 + $0x18] sm:$0xf]
    %v780 = vld [vmem:[#allocation17 + $0x1c] sm:$0xf]
    %v781 = vld [vmem:[#allocation17 + $0x20] sm:$0xf]
    %v782 = vld [vmem:[#allocation17 + $0x24] sm:$0xf]
    %v783 = vld [vmem:[#allocation17 + $0x28] sm:$0xf]
    %v784 = vld [vmem:[#allocation17 + $0x2c] sm:$0xf]
    %v785 = vld [vmem:[#allocation17 + $0x30] sm:$0xf]
    %v786 = vld [vmem:[#allocation17 + $0x34] sm:$0xf]
    %v787 = vld [vmem:[#allocation17 + $0x38] sm:$0xf]
    %v788 = vld [vmem:[#allocation17 + $0x3c] sm:$0xf]
    %v789 = vld [vmem:[%s11] sm:$0x1]
    %v791 = vlaneseq
    %v792 = vshrl.u32 %v791, 7
    %v793 = vsub.s32 0, %v792
    %v794 = vrot.slane %v789, %v793
    %v812 = vunpack.c.l.b16 %v773
    %v813 = vunpack.c.l.b16 %v774
    %v814 = vunpack.c.l.b16 %v775
    %v815 = vunpack.c.l.b16 %v776
    %v816 = vunpack.c.l.b16 %v777
    %v817 = vunpack.c.l.b16 %v778
    %v818 = vunpack.c.l.b16 %v779
    %v819 = vunpack.c.l.b16 %v780
    %v820 = vunpack.c.l.b16 %v781
    %v821 = vunpack.c.l.b16 %v782
    %v822 = vunpack.c.l.b16 %v783
    %v823 = vunpack.c.l.b16 %v784
    %v824 = vunpack.c.l.b16 %v785
    %v825 = vunpack.c.l.b16 %v786
    %v826 = vunpack.c.l.b16 %v787
    %v827 = vunpack.c.l.b16 %v788
    %v828 = vpack.c.b16 %v813, %v812
    %v829 = vpack.c.b16 %v815, %v814
    %v830 = vpack.c.b16 %v817, %v816
    %v831 = vpack.c.b16 %v819, %v818
    %v832 = vpack.c.b16 %v821, %v820
    %v833 = vpack.c.b16 %v823, %v822
    %v834 = vpack.c.b16 %v825, %v824
    %v835 = vpack.c.b16 %v827, %v826
    %844 = vmatprep.subr.bf16.mxu0 0
    %845 = vmatpush1.bf16.msra.mxu0 %v835
    %846 = vmatprep.subr.bf16.mxu0 0
    %847 = vmatpush1.bf16.msra.mxu0 %v834
    %848 = vmatprep.subr.bf16.mxu0 0
    %849 = vmatpush1.bf16.msra.mxu0 %v833
    %850 = vmatprep.subr.bf16.mxu0 0
    %851 = vmatpush1.bf16.msra.mxu0 %v832
    %852 = vmatprep.subr.bf16.mxu0 0
    %853 = vmatpush1.bf16.msra.mxu0 %v831
    %854 = vmatprep.subr.bf16.mxu0 0
    %855 = vmatpush1.bf16.msra.mxu0 %v830
    %856 = vmatprep.subr.bf16.mxu0 0
    %857 = vmatpush1.bf16.msra.mxu0 %v829
    %858 = vmatprep.subr.bf16.mxu0 0
    %859 = vmatpush1.bf16.msra.mxu0 %v828
    %860 = vmatprep.subr.bf16.mxu0 0
    %861 = vmatpush2.bf16.msra.mxu0 0
    %862 = vmatprep.subr.bf16.mxu0 0
    %863 = vmatpush2.bf16.msra.mxu0 0
    %864 = vmatprep.subr.bf16.mxu0 0
    %865 = vmatpush2.bf16.msra.mxu0 0
    %866 = vmatprep.subr.bf16.mxu0 0
    %867 = vmatpush2.bf16.msra.mxu0 0
    %868 = vmatprep.subr.bf16.mxu0 0
    %869 = vmatpush2.bf16.msra.mxu0 0
    %870 = vmatprep.subr.bf16.mxu0 0
    %871 = vmatpush2.bf16.msra.mxu0 0
    %872 = vmatprep.subr.bf16.mxu0 0
    %873 = vmatpush2.bf16.msra.mxu0 0
    %874 = vmatprep.subr.bf16.mxu0 0
    %875 = vmatpush2.bf16.msra.mxu0 0
    %876 = vmatprep.mubr.bf16.mxu0 0
    %877 = vmatmul.mubr.bf16.gmra.mxu0 %v772
    %v878 = vpop.f32.mrf.mxu0
    %v879 = vadd.f32 %v794, %v878
    %v880 = vpop.f32.mrf.mxu0
    %v881 = vpop.f32.mrf.mxu0
    %v882 = vadd.f32 %v794, %v881
    %v883 = vpop.f32.mrf.mxu0
    %884 = vdwg.mxu0
    %v885 = vtanh.pop %v879
    %v886 = vtanh.pop %v882
    %v887 = vpack.c.bf16 %v771, %v771
    %888 = vmatprep.subr.bf16.mxu0 0
    %889 = vmatpush1.bf16.msra.mxu0 %v835
    %890 = vmatprep.subr.bf16.mxu0 0
    %891 = vmatpush1.bf16.msra.mxu0 %v834
    %892 = vmatprep.subr.bf16.mxu0 0
    %893 = vmatpush1.bf16.msra.mxu0 %v833
    %894 = vmatprep.subr.bf16.mxu0 0
    %895 = vmatpush1.bf16.msra.mxu0 %v832
    %896 = vmatprep.subr.bf16.mxu0 0
    %897 = vmatpush1.bf16.msra.mxu0 %v831
    %898 = vmatprep.subr.bf16.mxu0 0
    %899 = vmatpush1.bf16.msra.mxu0 %v830
    %900 = vmatprep.subr.bf16.mxu0 0
    %901 = vmatpush1.bf16.msra.mxu0 %v829
    %902 = vmatprep.subr.bf16.mxu0 0
    %903 = vmatpush1.bf16.msra.mxu0 %v828
    %904 = vmatprep.subr.bf16.mxu0 0
    %905 = vmatpush2.bf16.msra.mxu0 0
    %906 = vmatprep.subr.bf16.mxu0 0
    %907 = vmatpush2.bf16.msra.mxu0 0
    %908 = vmatprep.subr.bf16.mxu0 0
    %909 = vmatpush2.bf16.msra.mxu0 0
    %910 = vmatprep.subr.bf16.mxu0 0
    %911 = vmatpush2.bf16.msra.mxu0 0
    %912 = vmatprep.subr.bf16.mxu0 0
    %913 = vmatpush2.bf16.msra.mxu0 0
    %914 = vmatprep.subr.bf16.mxu0 0
    %915 = vmatpush2.bf16.msra.mxu0 0
    %916 = vmatprep.subr.bf16.mxu0 0
    %917 = vmatpush2.bf16.msra.mxu0 0
    %918 = vmatprep.subr.bf16.mxu0 0
    %919 = vmatpush2.bf16.msra.mxu0 0
    %920 = vmatprep.mubr.bf16.mxu0 0
    %921 = vmatmul.mubr.bf16.gmra.mxu0 %v887
    %v922 = vpop.f32.mrf.mxu0
    %v923 = vadd.f32 %v794, %v922
    %v924 = vpop.f32.mrf.mxu0
    %v925 = vpop.f32.mrf.mxu0
    %v926 = vpop.f32.mrf.mxu0
    %927 = vdwg.mxu0
    %v928 = vtanh.pop %v923
    %929 = vst [vmem:[#allocation18] sm:$0xff] %v885
    %930 = vst [vmem:[#allocation18 + $0x8] sm:$0xff] %v886
    %931 = vst [vmem:[#allocation19] sm:$0x3] %v928
    // Predicated region
    $region78: #{tpu_custom_call.1} parent=1 // pred_check
      _
    $region79: #{tpu_custom_call.1} parent=1 // pred_check_branch
      %933 = sbr.rel (0) target = $region81
    $region80: #{tpu_custom_call.1} parent=1 // pred_region
      %s935 = ssub.s32 256, 256
      %936 = vsyncadd [#allocation8], %s935
      %s937 = sshll.u32 [#allocation18], 4
      %s938 = int_to_ptr.vmem [resolvable:$true] %s937
      %943 = dma.vmem_to_hbm [thread:$0]  %s938, 256, %s12, [#allocation8], 128, 128, 8
    $region81: #{tpu_custom_call.1} parent=1 // pred_fallthru
      _
    // Predicated region
    $region82: #{tpu_custom_call.1} parent=1 // pred_check
      _
    $region83: #{tpu_custom_call.1} parent=1 // pred_check_branch
      %945 = sbr.rel (0) target = $region85
    $region84: #{tpu_custom_call.1} parent=1 // pred_region
      %s947 = ssub.s32 32, 32
      %948 = vsyncadd [#allocation20], %s947
      %s950 = sshll.u32 [#allocation19], 4
      %s951 = int_to_ptr.vmem [resolvable:$true] %s950
      %953 = dma.vmem_to_hbm [thread:$0]  %s951, 32, %s13, [#allocation20]
    $region85: #{tpu_custom_call.1} parent=1 // pred_fallthru
      _
    // Predicated region
    $region86: #{tpu_custom_call.1} parent=1 // pred_check
      _
    $region87: #{tpu_custom_call.1} parent=1 // pred_check_branch
      %955 = sbr.rel (0) target = $region89
    $region88: #{tpu_custom_call.1} parent=1 // pred_region
      %956 = dma.done [#allocation8], 256
    $region89: #{tpu_custom_call.1} parent=1 // pred_fallthru
      _
    // Predicated region
    $region90: #{tpu_custom_call.1} parent=1 // pred_check
      _
    $region91: #{tpu_custom_call.1} parent=1 // pred_check_branch
      %958 = sbr.rel (0) target = $region93
    $region92: #{tpu_custom_call.1} parent=1 // pred_region
      %959 = dma.done [#allocation20], 32
    $region93: #{tpu_custom_call.1} parent=1 // pred_fallthru
      _
    %960 = vsyncpa [#allocation7], 1
    %961 = vsyncpa [#allocation10], 1
    %962 = vsyncpa [#allocation13], 1
    %963 = vsyncpa [#allocation16], 1
    %964 = vsyncpa [#allocation8], 1
    %965 = vsyncpa [#allocation20], 1

</llo_original>
